<compile_context>
chip_gen: v6e
topology: v6e:2x2x1
jax: 0.10.0
libtpu: 0.0.40
codegen_flags: <defaults>
</compile_context>

<pallas_src>
import jax
import jax.numpy as jnp
from jax.experimental import pallas as pl
from jax.experimental.pallas import tpu as pltpu

_HAS_BUFFERED = hasattr(pl, "Buffered")


# --------------------------------------------------------------------------- #
# Helpers
# --------------------------------------------------------------------------- #
def _spec(shape, index_map, buffers=None):
    """BlockSpec; optionally requests deeper input pipelining (guarded)."""
    if buffers is not None and _HAS_BUFFERED:
        try:
            return pl.BlockSpec(shape, index_map, pipeline_mode=pl.Buffered(buffers))
        except TypeError:  # older jax without pipeline_mode / kw-only ctor
            pass
    return pl.BlockSpec(shape, index_map)


def _vmem_limit_bytes():
    cap = 64 * 1024 * 1024  # conservative default = v7x per-core VMEM
    try:
        cap = int(pltpu.get_tpu_info().vmem_capacity_bytes)
    except Exception:
        pass
    return min((cap * 3) // 4, 100 * 1024 * 1024)


def _pick_pixel_tile(hw, max_bytes_per_pixel, vmem_budget, cap_override=None):
    """Largest lane-aligned pixel tile whose ~3x-buffered stream fits the budget.

    Returns (tile, padded_hw). padded_hw == hw unless no 128-multiple divisor
    of hw fits, in which case hw is zero-padded up to a tile multiple.
    """
    cap = 4096 if cap_override is None else max(128, int(cap_override))
    by_budget = vmem_budget // max(1, 3 * max_bytes_per_pixel)
    budget_tp = max(128, (by_budget // 128) * 128)
    cap = min(cap, budget_tp)
    if hw <= cap:
        return hw, hw                       # one full-HW block (full-dim legal)
    t = cap
    while t >= 128:
        if hw % t == 0:
            return t, hw                    # exact 128-multiple divisor
        t -= 128
    tp = cap                                # no divisor: pad HW to tile multiple
    return tp, ((hw + tp - 1) // tp) * tp


# --------------------------------------------------------------------------- #
# Kernels
# --------------------------------------------------------------------------- #
def _conv_pair(g_ref, x_ref, wg_ref, wx_ref):
    g1 = jnp.dot(wg_ref[...], g_ref[0], preferred_element_type=jnp.float32)
    x1 = jnp.dot(wx_ref[...], x_ref[0], preferred_element_type=jnp.float32)
    return g1, x1


def _accumulate_stats(pi, g1, x1, stats_ref, sg, sgg, sx, sxx):
    """Fused per-channel BN sums: scratch-column accumulate, emit once."""
    @pl.when(pi == 0)
    def _():
        sg[...] = jnp.zeros_like(sg)
        sgg[...] = jnp.zeros_like(sgg)
        sx[...] = jnp.zeros_like(sx)
        sxx[...] = jnp.zeros_like(sxx)

    sg[...] += jnp.sum(g1, axis=-1, keepdims=True)
    sgg[...] += jnp.sum(g1 * g1, axis=-1, keepdims=True)
    sx[...] += jnp.sum(x1, axis=-1, keepdims=True)
    sxx[...] += jnp.sum(x1 * x1, axis=-1, keepdims=True)

    @pl.when(pi == pl.num_programs(2) - 1)
    def _():
        stats_ref[0, 0] = jnp.concatenate(
            [sg[...], sgg[...], sx[...], sxx[...]], axis=-1)


def _pass1_kernel(g_ref, x_ref, wg_ref, wx_ref, stats_ref, sg, sgg, sx, sxx):
    """W_g / W_x 1x1 convs + fused BN statistics (no activation caching)."""
    g1, x1 = _conv_pair(g_ref, x_ref, wg_ref, wx_ref)
    _accumulate_stats(pl.program_id(2), g1, x1, stats_ref, sg, sgg, sx, sxx)


def _pass1_cache_kernel(g_ref, x_ref, wg_ref, wx_ref,
                        g1c_ref, x1c_ref, stats_ref, sg, sgg, sx, sxx):
    """Same as _pass1_kernel but also writes g1 / x1 (bf16) to HBM."""
    g1, x1 = _conv_pair(g_ref, x_ref, wg_ref, wx_ref)
    g1c_ref[...] = g1[None].astype(g1c_ref.dtype)
    x1c_ref[...] = x1[None].astype(x1c_ref.dtype)
    _accumulate_stats(pl.program_id(2), g1, x1, stats_ref, sg, sgg, sx, sxx)


def _pass2_kernel(g_ref, x_ref, wgs_ref, wxs_ref, shift_ref, wpsi_ref, psi_ref):
    """Recompute path: BN scale folded into weights; h=ReLU(.)+shift; psi conv."""
    g1 = jnp.dot(wgs_ref[...], g_ref[0], preferred_element_type=jnp.float32)
    x1 = jnp.dot(wxs_ref[...], x_ref[0], preferred_element_type=jnp.float32)
    h = jnp.maximum(g1 + x1 + shift_ref[...], 0.0)
    psi_ref[...] = jnp.dot(wpsi_ref[...], h,
                           preferred_element_type=jnp.float32)[None]


def _pass2_cache_kernel(g1c_ref, x1c_ref, sgc_ref, sxc_ref, shift_ref, wpsi_ref,
                        psi_ref):
    """Cache path: normalize cached g1/x1, ReLU, psi 1x1 conv."""
    g1 = g1c_ref[0].astype(jnp.float32)
    x1 = x1c_ref[0].astype(jnp.float32)
    h = jnp.maximum(g1 * sgc_ref[...] + x1 * sxc_ref[...] + shift_ref[...], 0.0)
    psi_ref[...] = jnp.dot(wpsi_ref[...], h,
                           preferred_element_type=jnp.float32)[None]


def _gate_kernel(x_ref, psi_ref, paff_ref, o_ref):
    """psi = sigmoid(scale * psi_pre + shift); out = x * psi.

    paff_ref is a (2,) f32 array in SMEM: [scale_psi, shift_psi].
    """
    z = psi_ref[0] * paff_ref[0] + paff_ref[1]           # (1, TP) f32
    gate = jax.nn.sigmoid(z).astype(x_ref.dtype)         # EUP, native dtype mul
    o_ref[...] = (x_ref[...] * gate[None]).astype(o_ref.dtype)


# --------------------------------------------------------------------------- #
# Wrapper
# --------------------------------------------------------------------------- #
def attention_block_forward(g, x,
                            wg, bg, gamma_g, beta_g,
                            wx, bx, gamma_x, beta_x,
                            wpsi, bpsi, gamma_p, beta_p,
                            eps=1e-5, cache_g1x1=None, pixel_tile_cap=None):
    """Forward pass of Attention_block (train-mode BatchNorm).

    g : (N, F_g, H, W)   x : (N, F_l, H, W)   (any float dtype; kept native)
    wg : (F_int, F_g, 1, 1)  wx : (F_int, F_l, 1, 1)  wpsi : (1, F_int, 1, 1)
    Conv biases are accepted for parity with nn.Conv2d but mathematically
    redundant before train-mode BatchNorm. Returns (N, F_l, H, W) in x.dtype.
    """
    del bg, bx, bpsi  # exactly absorbed by the BN mean subtraction (train mode)

    N, F_g, H, W = g.shape
    _, F_l, _, _ = x.shape
    F_int = wg.shape[0]
    HW = H * W
    out_dtype = x.dtype

    g3 = g.reshape(N, F_g, HW)           # pixels on the lane axis, native dtype
    x3 = x.reshape(N, F_l, HW)

    ib_g = jnp.dtype(g3.dtype).itemsize
    ib_x = jnp.dtype(x3.dtype).itemsize
    ob = jnp.dtype(out_dtype).itemsize
    cache_dtype = jnp.bfloat16
    cb = 2                               # bytes per cached g1/x1 element

    if cache_g1x1 is None:
        # Cache extra traffic (write + read 2*F_int bf16 channels) vs. the cost
        # of re-reading g and x in pass 2.
        use_cache = (4 * F_int * cb) < (F_g * ib_g + F_l * ib_x)
    else:
        use_cache = bool(cache_g1x1)

    gx_bytes = F_g * ib_g + F_l * ib_x
    if use_cache:
        ppb = max(gx_bytes + 2 * F_int * cb, 2 * F_int * cb + 4,
                  F_l * (ib_x + ob) + 4)
    else:
        ppb = max(gx_bytes + 4, F_l * (ib_x + ob) + 4)

    vmem_limit = _vmem_limit_bytes()
    TP, HW_pad = _pick_pixel_tile(HW, ppb, vmem_limit // 2, pixel_tile_cap)
    if HW_pad != HW:
        pad = HW_pad - HW
        g3 = jnp.pad(g3, ((0, 0), (0, 0), (0, pad)))
        x3 = jnp.pad(x3, ((0, 0), (0, 0), (0, pad)))
    n_pt = HW_pad // TP
    p_out = 2 if (n_pt % 2 == 0 and n_pt >= 2) else 1   # v7x: 2 TCs
    n_in = n_pt // p_out
    buf = 3 if N * n_pt >= 3 else None
    cnt = jnp.float32(N * HW)            # actual pixel count (padding adds zeros)

    wg_f = wg.reshape(F_int, F_g).astype(jnp.float32)
    wx_f = wx.reshape(F_int, F_l).astype(jnp.float32)
    wp_f = wpsi.reshape(1, F_int).astype(jnp.float32)

    red_params = pltpu.CompilerParams(
        dimension_semantics=("parallel", "parallel", "arbitrary"),
        vmem_limit_bytes=vmem_limit)
    par_params = pltpu.CompilerParams(
        dimension_semantics=("parallel", "parallel"),
        vmem_limit_bytes=vmem_limit)

    # --- Pass 1: W_g / W_x 1x1 convs + fused per-channel BN statistics -------
    pix1 = lambda n, po, pi: (n, 0, po * n_in + pi)
    p1_in_specs = [
        _spec((1, F_g, TP), pix1, buf),
        _spec((1, F_l, TP), pix1, buf),
        pl.BlockSpec((F_int, F_g), lambda n, po, pi: (0, 0)),
        pl.BlockSpec((F_int, F_l), lambda n, po, pi: (0, 0)),
    ]
    stats_spec = pl.BlockSpec((1, 1, F_int, 4), lambda n, po, pi: (n, po, 0, 0))
    stats_shape = jax.ShapeDtypeStruct((N, p_out, F_int, 4), jnp.float32)
    p1_scratch = [pltpu.VMEM((F_int, 1), jnp.float32)] * 4
    wg_mm = wg_f.astype(g3.dtype)
    wx_mm = wx_f.astype(x3.dtype)

    if use_cache:
        cache_shape = jax.ShapeDtypeStruct((N, F_int, HW_pad), cache_dtype)
        g1c, x1c, stats = pl.pallas_call(
            _pass1_cache_kernel,
            out_shape=(cache_shape, cache_shape, stats_shape),
            grid=(N, p_out, n_in),
            in_specs=p1_in_specs,
            out_specs=(pl.BlockSpec((1, F_int, TP), pix1),
                       pl.BlockSpec((1, F_int, TP), pix1),
                       stats_spec),
            scratch_shapes=p1_scratch,
            compiler_params=red_params,
        )(g3, x3, wg_mm, wx_mm)
    else:
        stats = pl.pallas_call(
            _pass1_kernel,
            out_shape=stats_shape,
            grid=(N, p_out, n_in),
            in_specs=p1_in_specs,
            out_specs=stats_spec,
            scratch_shapes=p1_scratch,
            compiler_params=red_params,
        )(g3, x3, wg_mm, wx_mm)

    tot = jnp.sum(stats, axis=(0, 1))                     # (F_int, 4)
    mean_g = tot[:, 0] / cnt
    var_g = jnp.maximum(tot[:, 1] / cnt - mean_g * mean_g, 0.0)
    mean_x = tot[:, 2] / cnt
    var_x = jnp.maximum(tot[:, 3] / cnt - mean_x * mean_x, 0.0)
    scale_g = gamma_g.astype(jnp.float32) * jax.lax.rsqrt(var_g + eps)
    shift_g = beta_g.astype(jnp.float32) - mean_g * scale_g
    scale_x = gamma_x.astype(jnp.float32) * jax.lax.rsqrt(var_x + eps)
    shift_x = beta_x.astype(jnp.float32) - mean_x * scale_x
    shift_col = (shift_g + shift_x).reshape(F_int, 1)

    # --- Pass 2: normalize + ReLU + psi 1x1 conv ------------------------------
    pix2 = lambda n, p: (n, 0, p)
    small = lambda shape: pl.BlockSpec(shape, lambda n, p: (0, 0))
    psi_shape = jax.ShapeDtypeStruct((N, 1, HW_pad), jnp.float32)
    psi_spec = pl.BlockSpec((1, 1, TP), pix2)

    if use_cache:
        psi_pre = pl.pallas_call(
            _pass2_cache_kernel,
            out_shape=psi_shape,
            grid=(N, n_pt),
            in_specs=[
                _spec((1, F_int, TP), pix2, buf),
                _spec((1, F_int, TP), pix2, buf),
                small((F_int, 1)), small((F_int, 1)), small((F_int, 1)),
                small((1, F_int)),
            ],
            out_specs=psi_spec,
            compiler_params=par_params,
        )(g1c, x1c, scale_g.reshape(F_int, 1), scale_x.reshape(F_int, 1),
          shift_col, wp_f)
    else:
        # Fold BN scale into the conv weights (one fewer VPU mul per tile).
        wgs = (wg_f * scale_g[:, None]).astype(g3.dtype)
        wxs = (wx_f * scale_x[:, None]).astype(x3.dtype)
        psi_pre = pl.pallas_call(
            _pass2_kernel,
            out_shape=psi_shape,
            grid=(N, n_pt),
            in_specs=[
                _spec((1, F_g, TP), pix2, buf),
                _spec((1, F_l, TP), pix2, buf),
                small((F_int, F_g)), small((F_int, F_l)),
                small((F_int, 1)), small((1, F_int)),
            ],
            out_specs=psi_spec,
            compiler_params=par_params,
        )(g3, x3, wgs, wxs, shift_col, wp_f)

    # psi BN statistics over the *valid* pixels (single channel, tiny reduce;
    # done in XLA so the kernel needs no tail-tile masking when HW is padded).
    psi_valid = psi_pre[:, 0, :HW]
    mean_p = jnp.mean(psi_valid)
    var_p = jnp.maximum(jnp.var(psi_valid), 0.0)
    scale_p = gamma_p.astype(jnp.float32)[0] * jax.lax.rsqrt(var_p + eps)
    shift_p = beta_p.astype(jnp.float32)[0] - mean_p * scale_p
    paff = jnp.stack([scale_p, shift_p])                  # (2,) f32 -> SMEM

    # --- Pass 3: psi BN + sigmoid + gate x ------------------------------------
    out = pl.pallas_call(
        _gate_kernel,
        out_shape=jax.ShapeDtypeStruct((N, F_l, HW_pad), out_dtype),
        grid=(N, n_pt),
        in_specs=[
            _spec((1, F_l, TP), pix2, buf),
            _spec((1, 1, TP), pix2, buf),
            pl.BlockSpec(memory_space=pltpu.MemorySpace.SMEM),
        ],
        out_specs=pl.BlockSpec((1, F_l, TP), pix2),
        compiler_params=par_params,
    )(x3, psi_pre, paff)

    if HW_pad != HW:
        out = out[:, :, :HW]
    return out.reshape(N, F_l, H, W)


# --------------------------------------------------------------------------- #
# Pure-JAX reference (matches the PyTorch module, biases included)
# --------------------------------------------------------------------------- #
def _reference_forward(g, x, wg, bg, gamma_g, beta_g, wx, bx, gamma_x, beta_x,
                       wpsi, bpsi, gamma_p, beta_p, eps=1e-5):
    def conv1x1(z, w, b):
        y = jnp.einsum('nchw,oc->nohw', z, w[:, :, 0, 0])
        return y + b[None, :, None, None]

    def bn(y, gamma, beta):
        mean = jnp.mean(y, axis=(0, 2, 3), keepdims=True)
        var = jnp.mean((y - mean) ** 2, axis=(0, 2, 3), keepdims=True)
        return ((y - mean) * jax.lax.rsqrt(var + eps)
                * gamma[None, :, None, None] + beta[None, :, None, None])

    g1 = bn(conv1x1(g, wg, bg), gamma_g, beta_g)
    x1 = bn(conv1x1(x, wx, bx), gamma_x, beta_x)
    h = jnp.maximum(g1 + x1, 0.0)
    psi = jax.nn.sigmoid(bn(conv1x1(h, wpsi, bpsi), gamma_p, beta_p))
    return x * psi


# --------------------------------------------------------------------------- #
# Self-test
# --------------------------------------------------------------------------- #
if __name__ == "__main__":
    key = jax.random.PRNGKey(0)

    def make_params(k, F_g, F_l, F_int):
        ks = jax.random.split(k, 8)
        wg = jax.random.normal(ks[0], (F_int, F_g, 1, 1), jnp.float32) * 0.3
        bg = jax.random.normal(ks[1], (F_int,), jnp.float32) * 0.1
        wx = jax.random.normal(ks[2], (F_int, F_l, 1, 1), jnp.float32) * 0.3
        bx = jax.random.normal(ks[3], (F_int,), jnp.float32) * 0.1
        wpsi = jax.random.normal(ks[4], (1, F_int, 1, 1), jnp.float32) * 0.3
        bpsi = jax.random.normal(ks[5], (1,), jnp.float32) * 0.1
        gamma_g = 1.0 + 0.1 * jax.random.normal(ks[6], (F_int,), jnp.float32)
        beta_g = 0.1 * jax.random.normal(ks[7], (F_int,), jnp.float32)
        gamma_x = jnp.ones((F_int,), jnp.float32)
        beta_x = jnp.zeros((F_int,), jnp.float32)
        gamma_p = jnp.ones((1,), jnp.float32)
        beta_p = jnp.zeros((1,), jnp.float32)
        return (wg, bg, gamma_g, beta_g, wx, bx, gamma_x, beta_x,
                wpsi, bpsi, gamma_p, beta_p)

    def check(name, g, x, params, tol, **kw):
        out = jax.block_until_ready(attention_block_forward(g, x, *params, **kw))
        ref = _reference_forward(g.astype(jnp.float32), x.astype(jnp.float32),
                                 *params)
        assert out.shape == x.shape, (name, out.shape)
        assert out.dtype == x.dtype, (name, out.dtype)
        err = float(jnp.max(jnp.abs(out.astype(jnp.float32) - ref)))
        assert err < tol, f"{name}: max abs error {err} (tol {tol})"

    # Case 1: small shapes, auto settings (exercises the g1/x1-cache path),
    # the recompute path, and a bf16 native-dtype run.
    N, F_g, F_l, F_int, H, W = 2, 8, 8, 4, 16, 16
    k1, k2, k3, key = jax.random.split(key, 4)
    g = jax.random.normal(k1, (N, F_g, H, W), jnp.float32)
    x = jax.random.normal(k2, (N, F_l, H, W), jnp.float32)
    params = make_params(k3, F_g, F_l, F_int)
    check("auto", g, x, params, 5e-2)
    check("recompute", g, x, params, 5e-2, cache_g1x1=False)
    check("bf16", g.astype(jnp.bfloat16), x.astype(jnp.bfloat16), params, 2.5e-1)

    # Case 2: H*W not a multiple of 128 -> zero-padded lane-aligned tiles,
    # multi-tile BN reduction and the 2-way pixel-axis outer split; both paths.
    N, F_g, F_l, F_int, H, W = 2, 12, 8, 6, 20, 20
    k1, k2, k3, key = jax.random.split(key, 4)
    g = jax.random.normal(k1, (N, F_g, H, W), jnp.float32)
    x = jax.random.normal(k2, (N, F_l, H, W), jnp.float32)
    params = make_params(k3, F_g, F_l, F_int)
    check("pad-cache", g, x, params, 5e-2, cache_g1x1=True, pixel_tile_cap=128)
    check("pad-recompute", g, x, params, 5e-2, cache_g1x1=False,
          pixel_tile_cap=128)

    print("KERNEL_OK")
</pallas_src>

<mosaic_0001>
module attributes {stable_mosaic.version = 11 : i64} {
  func.func @_pass1_cache_kernel(%arg0: i32, %arg1: i32, %arg2: i32, %arg3: memref<1x8x256xf32, #tpu.memory_space<vmem>>, %arg4: memref<1x8x256xf32, #tpu.memory_space<vmem>>, %arg5: memref<4x8xf32, #tpu.memory_space<vmem>>, %arg6: memref<4x8xf32, #tpu.memory_space<vmem>>, %arg7: memref<1x4x256xbf16, #tpu.memory_space<vmem>>, %arg8: memref<1x4x256xbf16, #tpu.memory_space<vmem>>, %arg9: memref<1x1x4x4xf32, #tpu.memory_space<vmem>>, %arg10: memref<4x1xf32, #tpu.memory_space<vmem>>, %arg11: memref<4x1xf32, #tpu.memory_space<vmem>>, %arg12: memref<4x1xf32, #tpu.memory_space<vmem>>, %arg13: memref<4x1xf32, #tpu.memory_space<vmem>>) attributes {dimension_semantics = [#tpu.dimension_semantics<parallel>, #tpu.dimension_semantics<parallel>, #tpu.dimension_semantics<arbitrary>], iteration_bounds = array<i64: 2, 1, 1>, scalar_prefetch = 0 : i64, scratch_operands = 4 : i64, tpu.core_type = #tpu.core_type<tc>, window_params = [{transform_indices = @transform_0, window_bounds = array<i64: 1, 8, 256>}, {transform_indices = @transform_1, window_bounds = array<i64: 1, 8, 256>}, {pipeline_mode = #tpu.pipeline_mode<synchronous>, transform_indices = @transform_2, window_bounds = array<i64: 4, 8>}, {pipeline_mode = #tpu.pipeline_mode<synchronous>, transform_indices = @transform_3, window_bounds = array<i64: 4, 8>}, {transform_indices = @transform_4, window_bounds = array<i64: 1, 4, 256>}, {transform_indices = @transform_5, window_bounds = array<i64: 1, 4, 256>}, {transform_indices = @transform_6, window_bounds = array<i64: 1, 1, 4, 4>}]} {
    %c0 = arith.constant 0 : index
    %c0_0 = arith.constant 0 : index
    %0 = vector.load %arg5[%c0, %c0_0] : memref<4x8xf32, #tpu.memory_space<vmem>>, vector<4x8xf32>
    %c0_1 = arith.constant 0 : index
    %c0_2 = arith.constant 0 : index
    %c0_3 = arith.constant 0 : index
    %1 = vector.load %arg3[%c0_1, %c0_2, %c0_3] : memref<1x8x256xf32, #tpu.memory_space<vmem>>, vector<1x8x256xf32>
    %2 = vector.shape_cast %1 : vector<1x8x256xf32> to vector<8x256xf32>
    %cst = arith.constant dense<0.000000e+00> : vector<4x256xf32>
    %3 = tpu.matmul %0, %2, %cst {dimension_numbers = #tpu.dot_dimension_numbers<[1], [0], [0], [1], [0, 0, 1, 1], [], []>} : vector<4x8xf32>, vector<8x256xf32>, vector<4x256xf32> -> vector<4x256xf32>
    %c0_4 = arith.constant 0 : index
    %c0_5 = arith.constant 0 : index
    %4 = vector.load %arg6[%c0_4, %c0_5] : memref<4x8xf32, #tpu.memory_space<vmem>>, vector<4x8xf32>
    %c0_6 = arith.constant 0 : index
    %c0_7 = arith.constant 0 : index
    %c0_8 = arith.constant 0 : index
    %5 = vector.load %arg4[%c0_6, %c0_7, %c0_8] : memref<1x8x256xf32, #tpu.memory_space<vmem>>, vector<1x8x256xf32>
    %6 = vector.shape_cast %5 : vector<1x8x256xf32> to vector<8x256xf32>
    %cst_9 = arith.constant dense<0.000000e+00> : vector<4x256xf32>
    %7 = tpu.matmul %4, %6, %cst_9 {dimension_numbers = #tpu.dot_dimension_numbers<[1], [0], [0], [1], [0, 0, 1, 1], [], []>} : vector<4x8xf32>, vector<8x256xf32>, vector<4x256xf32> -> vector<4x256xf32>
    %8 = vector.shape_cast %3 : vector<4x256xf32> to vector<1x4x256xf32>
    %9 = arith.truncf %8 : vector<1x4x256xf32> to vector<1x4x256xbf16>
    %c0_10 = arith.constant 0 : index
    %c0_11 = arith.constant 0 : index
    %c0_12 = arith.constant 0 : index
    %10 = vector.load %arg7[%c0_10, %c0_11, %c0_12] : memref<1x4x256xbf16, #tpu.memory_space<vmem>>, vector<1x4x256xbf16>
    tpu.vector_store %arg7[%c0_10, %c0_11, %c0_12], %9 {strides = array<i32>} : memref<1x4x256xbf16, #tpu.memory_space<vmem>>, vector<1x4x256xbf16>,
    %11 = vector.shape_cast %7 : vector<4x256xf32> to vector<1x4x256xf32>
    %12 = arith.truncf %11 : vector<1x4x256xf32> to vector<1x4x256xbf16>
    %c0_13 = arith.constant 0 : index
    %c0_14 = arith.constant 0 : index
    %c0_15 = arith.constant 0 : index
    %13 = vector.load %arg8[%c0_13, %c0_14, %c0_15] : memref<1x4x256xbf16, #tpu.memory_space<vmem>>, vector<1x4x256xbf16>
    tpu.vector_store %arg8[%c0_13, %c0_14, %c0_15], %12 {strides = array<i32>} : memref<1x4x256xbf16, #tpu.memory_space<vmem>>, vector<1x4x256xbf16>,
    %c0_i32 = arith.constant 0 : i32
    %14 = arith.cmpi eq, %arg2, %c0_i32 : i32
    %15 = arith.extui %14 : i1 to i32
    %c0_i32_16 = arith.constant 0 : i32
    %16 = arith.cmpi ne, %15, %c0_i32_16 : i32
    scf.if %16 {
      %cst_39 = arith.constant 0.000000e+00 : f32
      %42 = vector.broadcast %cst_39 : f32 to vector<4x1xf32>
      %c0_40 = arith.constant 0 : index
      %c0_41 = arith.constant 0 : index
      %43 = vector.load %arg10[%c0_40, %c0_41] : memref<4x1xf32, #tpu.memory_space<vmem>>, vector<4x1xf32>
      tpu.vector_store %arg10[%c0_40, %c0_41], %42 {strides = array<i32>} : memref<4x1xf32, #tpu.memory_space<vmem>>, vector<4x1xf32>,
      %cst_42 = arith.constant 0.000000e+00 : f32
      %44 = vector.broadcast %cst_42 : f32 to vector<4x1xf32>
      %c0_43 = arith.constant 0 : index
      %c0_44 = arith.constant 0 : index
      %45 = vector.load %arg11[%c0_43, %c0_44] : memref<4x1xf32, #tpu.memory_space<vmem>>, vector<4x1xf32>
      tpu.vector_store %arg11[%c0_43, %c0_44], %44 {strides = array<i32>} : memref<4x1xf32, #tpu.memory_space<vmem>>, vector<4x1xf32>,
      %cst_45 = arith.constant 0.000000e+00 : f32
      %46 = vector.broadcast %cst_45 : f32 to vector<4x1xf32>
      %c0_46 = arith.constant 0 : index
      %c0_47 = arith.constant 0 : index
      %47 = vector.load %arg12[%c0_46, %c0_47] : memref<4x1xf32, #tpu.memory_space<vmem>>, vector<4x1xf32>
      tpu.vector_store %arg12[%c0_46, %c0_47], %46 {strides = array<i32>} : memref<4x1xf32, #tpu.memory_space<vmem>>, vector<4x1xf32>,
      %cst_48 = arith.constant 0.000000e+00 : f32
      %48 = vector.broadcast %cst_48 : f32 to vector<4x1xf32>
      %c0_49 = arith.constant 0 : index
      %c0_50 = arith.constant 0 : index
      %49 = vector.load %arg13[%c0_49, %c0_50] : memref<4x1xf32, #tpu.memory_space<vmem>>, vector<4x1xf32>
      tpu.vector_store %arg13[%c0_49, %c0_50], %48 {strides = array<i32>} : memref<4x1xf32, #tpu.memory_space<vmem>>, vector<4x1xf32>,
    } else {
    }
    %c0_17 = arith.constant 0 : index
    %c0_18 = arith.constant 0 : index
    %17 = vector.load %arg10[%c0_17, %c0_18] : memref<4x1xf32, #tpu.memory_space<vmem>>, vector<4x1xf32>
    %cst_19 = arith.constant dense<0.000000e+00> : vector<4xf32>
    %18 = vector.multi_reduction <add>, %3, %cst_19 [1] : vector<4x256xf32> to vector<4xf32>
    %19 = vector.shape_cast %18 : vector<4xf32> to vector<4x1xf32>
    %20 = arith.addf %17, %19 : vector<4x1xf32>
    %c0_20 = arith.constant 0 : index
    %c0_21 = arith.constant 0 : index
    %21 = vector.load %arg10[%c0_20, %c0_21] : memref<4x1xf32, #tpu.memory_space<vmem>>, vector<4x1xf32>
    tpu.vector_store %arg10[%c0_20, %c0_21], %20 {strides = array<i32>} : memref<4x1xf32, #tpu.memory_space<vmem>>, vector<4x1xf32>,
    %c0_22 = arith.constant 0 : index
    %c0_23 = arith.constant 0 : index
    %22 = vector.load %arg11[%c0_22, %c0_23] : memref<4x1xf32, #tpu.memory_space<vmem>>, vector<4x1xf32>
    %23 = arith.mulf %3, %3 : vector<4x256xf32>
    %cst_24 = arith.constant dense<0.000000e+00> : vector<4xf32>
    %24 = vector.multi_reduction <add>, %23, %cst_24 [1] : vector<4x256xf32> to vector<4xf32>
    %25 = vector.shape_cast %24 : vector<4xf32> to vector<4x1xf32>
    %26 = arith.addf %22, %25 : vector<4x1xf32>
    %c0_25 = arith.constant 0 : index
    %c0_26 = arith.constant 0 : index
    %27 = vector.load %arg11[%c0_25, %c0_26] : memref<4x1xf32, #tpu.memory_space<vmem>>, vector<4x1xf32>
    tpu.vector_store %arg11[%c0_25, %c0_26], %26 {strides = array<i32>} : memref<4x1xf32, #tpu.memory_space<vmem>>, vector<4x1xf32>,
    %c0_27 = arith.constant 0 : index
    %c0_28 = arith.constant 0 : index
    %28 = vector.load %arg12[%c0_27, %c0_28] : memref<4x1xf32, #tpu.memory_space<vmem>>, vector<4x1xf32>
    %cst_29 = arith.constant dense<0.000000e+00> : vector<4xf32>
    %29 = vector.multi_reduction <add>, %7, %cst_29 [1] : vector<4x256xf32> to vector<4xf32>
    %30 = vector.shape_cast %29 : vector<4xf32> to vector<4x1xf32>
    %31 = arith.addf %28, %30 : vector<4x1xf32>
    %c0_30 = arith.constant 0 : index
    %c0_31 = arith.constant 0 : index
    %32 = vector.load %arg12[%c0_30, %c0_31] : memref<4x1xf32, #tpu.memory_space<vmem>>, vector<4x1xf32>
    tpu.vector_store %arg12[%c0_30, %c0_31], %31 {strides = array<i32>} : memref<4x1xf32, #tpu.memory_space<vmem>>, vector<4x1xf32>,
    %c0_32 = arith.constant 0 : index
    %c0_33 = arith.constant 0 : index
    %33 = vector.load %arg13[%c0_32, %c0_33] : memref<4x1xf32, #tpu.memory_space<vmem>>, vector<4x1xf32>
    %34 = arith.mulf %7, %7 : vector<4x256xf32>
    %cst_34 = arith.constant dense<0.000000e+00> : vector<4xf32>
    %35 = vector.multi_reduction <add>, %34, %cst_34 [1] : vector<4x256xf32> to vector<4xf32>
    %36 = vector.shape_cast %35 : vector<4xf32> to vector<4x1xf32>
    %37 = arith.addf %33, %36 : vector<4x1xf32>
    %c0_35 = arith.constant 0 : index
    %c0_36 = arith.constant 0 : index
    %38 = vector.load %arg13[%c0_35, %c0_36] : memref<4x1xf32, #tpu.memory_space<vmem>>, vector<4x1xf32>
    tpu.vector_store %arg13[%c0_35, %c0_36], %37 {strides = array<i32>} : memref<4x1xf32, #tpu.memory_space<vmem>>, vector<4x1xf32>,
    %c0_i32_37 = arith.constant 0 : i32
    %39 = arith.cmpi eq, %arg2, %c0_i32_37 : i32
    %40 = arith.extui %39 : i1 to i32
    %c0_i32_38 = arith.constant 0 : i32
    %41 = arith.cmpi ne, %40, %c0_i32_38 : i32
    scf.if %41 {
      %c0_39 = arith.constant 0 : index
      %c0_40 = arith.constant 0 : index
      %42 = vector.load %arg10[%c0_39, %c0_40] : memref<4x1xf32, #tpu.memory_space<vmem>>, vector<4x1xf32>
      %c0_41 = arith.constant 0 : index
      %c0_42 = arith.constant 0 : index
      %43 = vector.load %arg11[%c0_41, %c0_42] : memref<4x1xf32, #tpu.memory_space<vmem>>, vector<4x1xf32>
      %c0_43 = arith.constant 0 : index
      %c0_44 = arith.constant 0 : index
      %44 = vector.load %arg12[%c0_43, %c0_44] : memref<4x1xf32, #tpu.memory_space<vmem>>, vector<4x1xf32>
      %c0_45 = arith.constant 0 : index
      %c0_46 = arith.constant 0 : index
      %45 = vector.load %arg13[%c0_45, %c0_46] : memref<4x1xf32, #tpu.memory_space<vmem>>, vector<4x1xf32>
      %46 = tpu.concatenate %42, %43, %44, %45 in 1 : vector<4x1xf32>, vector<4x1xf32>, vector<4x1xf32>, vector<4x1xf32> -> vector<4x4xf32>
      %c0_47 = arith.constant 0 : index
      %c0_48 = arith.constant 0 : index
      %c0_49 = arith.constant 0 : index
      %c0_50 = arith.constant 0 : index
      %47 = vector.load %arg9[%c0_47, %c0_48, %c0_49, %c0_50] : memref<1x1x4x4xf32, #tpu.memory_space<vmem>>, vector<1x1x4x4xf32>
      %48 = vector.shape_cast %47 : vector<1x1x4x4xf32> to vector<4x4xf32>
      %49 = vector.shape_cast %46 : vector<4x4xf32> to vector<1x1x4x4xf32>
      tpu.vector_store %arg9[%c0_47, %c0_48, %c0_49, %c0_50], %49 {strides = array<i32>} : memref<1x1x4x4xf32, #tpu.memory_space<vmem>>, vector<1x1x4x4xf32>,
    } else {
    }
    return
  }
  func.func @transform_0(%arg0: i32, %arg1: i32, %arg2: i32) -> (i32, i32, i32) {
    %c1_i32 = arith.constant 1 : i32
    %0 = arith.muli %arg1, %c1_i32 : i32
    %1 = arith.addi %0, %arg2 : i32
    %c0_i32 = arith.constant 0 : i32
    %c0_i32_0 = arith.constant 0 : i32
    return %arg0, %c0_i32, %1 : i32, i32, i32
  }
  func.func @transform_1(%arg0: i32, %arg1: i32, %arg2: i32) -> (i32, i32, i32) {
    %c1_i32 = arith.constant 1 : i32
    %0 = arith.muli %arg1, %c1_i32 : i32
    %1 = arith.addi %0, %arg2 : i32
    %c0_i32 = arith.constant 0 : i32
    %c0_i32_0 = arith.constant 0 : i32
    return %arg0, %c0_i32, %1 : i32, i32, i32
  }
  func.func @transform_2(%arg0: i32, %arg1: i32, %arg2: i32) -> (i32, i32) {
    %c0_i32 = arith.constant 0 : i32
    %c0_i32_0 = arith.constant 0 : i32
    %c0_i32_1 = arith.constant 0 : i32
    return %c0_i32, %c0_i32_0 : i32, i32
  }
  func.func @transform_3(%arg0: i32, %arg1: i32, %arg2: i32) -> (i32, i32) {
    %c0_i32 = arith.constant 0 : i32
    %c0_i32_0 = arith.constant 0 : i32
    %c0_i32_1 = arith.constant 0 : i32
    return %c0_i32, %c0_i32_0 : i32, i32
  }
  func.func @transform_4(%arg0: i32, %arg1: i32, %arg2: i32) -> (i32, i32, i32) {
    %c1_i32 = arith.constant 1 : i32
    %0 = arith.muli %arg1, %c1_i32 : i32
    %1 = arith.addi %0, %arg2 : i32
    %c0_i32 = arith.constant 0 : i32
    %c0_i32_0 = arith.constant 0 : i32
    return %arg0, %c0_i32, %1 : i32, i32, i32
  }
  func.func @transform_5(%arg0: i32, %arg1: i32, %arg2: i32) -> (i32, i32, i32) {
    %c1_i32 = arith.constant 1 : i32
    %0 = arith.muli %arg1, %c1_i32 : i32
    %1 = arith.addi %0, %arg2 : i32
    %c0_i32 = arith.constant 0 : i32
    %c0_i32_0 = arith.constant 0 : i32
    return %arg0, %c0_i32, %1 : i32, i32, i32
  }
  func.func @transform_6(%arg0: i32, %arg1: i32, %arg2: i32) -> (i32, i32, i32, i32) {
    %c0_i32 = arith.constant 0 : i32
    %c0_i32_0 = arith.constant 0 : i32
    %c0_i32_1 = arith.constant 0 : i32
    return %arg0, %arg1, %c0_i32, %c0_i32_0 : i32, i32, i32, i32
  }
}

</mosaic_0001>

<llo_original>
// kernel: tpu_custom_call.1
$region0: #{tpu_custom_call.1}
  #allocation0 [shape = 'u32[]', space=smem, size = 0x4, offset = 0x4, fixed_abs, tag = 'smem constant byte address 0x4 - core index']
  #allocation1 [shape = 'u32[144,128]{1,0:T(1,128)}', space=vmem, size = 0x12000, scoped, tag = 'internal scratch']
  #allocation2 [shape = 'f32[4,1]{1,0:T(4,128)}', space=vmem, size = 0x800, scoped, tag = 'scratch operand']
  #allocation3 [shape = 'f32[4,1]{1,0:T(4,128)}', space=vmem, size = 0x800, scoped, tag = 'scratch operand']
  #allocation4 [shape = 'f32[4,1]{1,0:T(4,128)}', space=vmem, size = 0x800, scoped, tag = 'scratch operand']
  #allocation5 [shape = 'f32[4,1]{1,0:T(4,128)}', space=vmem, size = 0x800, scoped, tag = 'scratch operand']
  %s0 = inlined_call_operand.hbm [shape: f32[2,8,256], index: 0, kind: input, shape index: {}]
  %s1 = inlined_call_operand.hbm [shape: f32[2,8,256], index: 1, kind: input, shape index: {}]
  %s2 = inlined_call_operand.hbm [shape: f32[4,8], index: 2, kind: input, shape index: {}]
  %s3 = inlined_call_operand.vmem [shape: f32[4,8], index: 3, kind: input, shape index: {}]
  %s4 = inlined_call_operand.hbm [shape: bf16[2,4,256], index: 4, kind: output, shape index: {0}]
  %s5 = inlined_call_operand.hbm [shape: bf16[2,4,256], index: 5, kind: output, shape index: {1}]
  %s6 = inlined_call_operand.hbm [shape: f32[2,1,4,4], index: 6, kind: output, shape index: {2}]
  %7 = xla_tuple %s4, %s5, %s6
  %s8 = sld [smem:[#allocation0]]
  $region85: #{tpu_custom_call.1} parent=0
    _
  %s10 = ssub.s32 1, %s8
  %s11 = scalar_select 0, %s10, %s8
  $region1: #{tpu_custom_call.1} parent=0
    #allocation6 [shape = 'u8[16384]{0}', space=vmem, size = 0x4000, scoped, tag = 'input window, operand 0']
    #allocation7 [shape = 's32[2]{0}', space=sflag, size = 0x8, scoped, tag = 'scoped memory for tpu_custom_call.1']
    #allocation8 [shape = 's32[2]{0}', space=sflag, size = 0x8, scoped, tag = 'scoped memory for tpu_custom_call.1']
    #allocation9 [shape = 'u8[16384]{0}', space=vmem, size = 0x4000, scoped, tag = 'input window, operand 1']
    #allocation10 [shape = 's32[2]{0}', space=sflag, size = 0x8, scoped, tag = 'scoped memory for tpu_custom_call.1']
    #allocation11 [shape = 'u8[2048]{0}', space=vmem, size = 0x800, scoped, tag = 'input window, operand 2, single buffered']
    #allocation12 [shape = 'u8[4096]{0}', space=vmem, size = 0x1000, scoped, tag = 'output window, operand 0']
    #allocation13 [shape = 'u8[4096]{0}', space=vmem, size = 0x1000, scoped, tag = 'output window, operand 1']
    #allocation14 [shape = 's32[2]{0}', space=sflag, size = 0x8, scoped, tag = 'scoped memory for tpu_custom_call.1']
    #allocation15 [shape = 'u8[4096]{0}', space=vmem, size = 0x1000, scoped, tag = 'output window, operand 2']
    %12 = vsyncpa [#allocation7], 0
    %s13 = scalar_lea.sflag [#allocation7], 1
    %14 = vsyncpa %s13, 0
    %15 = vsyncpa [#allocation10], 0
    %s16 = scalar_lea.sflag [#allocation10], 1
    %17 = vsyncpa %s16, 0
    %18 = vsyncpa [#allocation8], 0
    %s19 = scalar_lea.sflag [#allocation8], 1
    %20 = vsyncpa %s19, 0
    %21 = vsyncpa [#allocation14], 0
    %s22 = scalar_lea.sflag [#allocation14], 1
    %23 = vsyncpa %s22, 0
    loop: start=0, step=1, limit=4
    $region2: #{tpu_custom_call.1} parent=1 // loop_pre_header
      _
    $region3: #{tpu_custom_call.1} parent=1 // loop_header
      %s25 = sphi 0, %s29
      %p26 = scmp.ge.s32.totalorder %s25, 4
      %s32 = sphi 0, %s51
      %s33 = sphi 0, %s47
      %s34 = sphi 0, %s43
      %s35 = sphi 0, %s32
      %s36 = sphi 0, %s33
      %s37 = sphi 0, %s34
      %s38 = sphi 0, %s35
      %s39 = sphi 0, %s36
      %s40 = sphi 0, %s37
      %s58 = sphi 0, %s60
      %s61 = sphi 0, %s58
      %s62 = sphi 0, %s61
      %s78 = sphi 0, %s62
      %s88 = sphi 0, %s90
      %s91 = sphi 0, %s88
      %s92 = sphi 0, %s91
      %s108 = sphi 0, %s92
      %s112 = sphi 0, %s112
      %s114 = sphi 0, %s112
      %s115 = sphi 0, %s114
      %s129 = sphi 0, %s115
      %s133 = sphi 0, %s133
      %s135 = sphi 0, %s133
      %s136 = sphi 0, %s135
      %s150 = sphi 0, %s136
      %s160 = sphi 0, %s162
      %s163 = sphi 0, %s160
      %s164 = sphi 0, %s163
      %s180 = sphi 0, %s164
      %s190 = sphi 0, %s192
      %s193 = sphi 0, %s190
      %s194 = sphi 0, %s193
      %s210 = sphi 0, %s194
      %s218 = sphi 0, %s220
      %s221 = sphi 0, %s218
      %s222 = sphi 0, %s221
      %s238 = sphi 0, %s222
    $region4: #{tpu_custom_call.1} parent=1 // loop_header_branch
      %28 = sbr.rel (%p26) target = $region8
    $region5: #{tpu_custom_call.1} parent=1 // loop_body
      %s30 = ssub.s32 %s25, 1
      %s31 = ssub.s32 %s25, 2
      %s41 = sadd.s32 1, %s34
      %p42 = scmp.ge.s32.totalorder %s41, 1
      %s43 = scalar_select %p42, 0, %s41
      %s44 = sadd.s32 1, %s33
      %s45 = scalar_select %p42, %s44, %s33
      %p46 = scmp.ge.s32.totalorder %s45, 1
      %s47 = scalar_select %p46, 0, %s45
      %s48 = sadd.s32 1, %s32
      %s49 = scalar_select %p46, %s48, %s32
      %p50 = scmp.ge.s32.totalorder %s49, 2
      %s51 = scalar_select %p50, 0, %s49
      %s52 = sadd.s32 %s33, %s34
      %s53 = sadd.s32 %s47, %s43
      %s54 = ssub.s32 %s32, %s51
      %s55 = ssub.s32 %s52, %s53
      %s56 = sor.u32 %s54, %s55
      %p57 = scmp.eq.s32.totalorder %s56, 0
      %s59 = sadd.s32 %s58, 1
      %s60 = scalar_select %p57, %s58, %s59
      %p63 = pneg %p57
      %p64 = scmp.eq.s32.totalorder %s25, 1
      %p65 = por %p63, %p64
      %p66 = scmp.ne.s32.totalorder %s58, %s61
      %p67 = scmp.eq.s32.totalorder %s25, 0
      %p68 = por %p66, %p67
      %p69 = scmp.ne.s32.totalorder %s58, %s61
      %p70 = scmp.eq.s32.totalorder %s30, 1
      %p71 = por %p69, %p70
      %p72 = scmp.ne.s32.totalorder %s61, %s62
      %p73 = scmp.eq.s32.totalorder %s30, 0
      %p74 = por %p72, %p73
      %p75 = scmp.ne.s32.totalorder %s61, %s62
      %p76 = scmp.eq.s32.totalorder %s31, 1
      %p77 = por %p75, %p76
      %p79 = scmp.ne.s32.totalorder %s62, %s78
      %p80 = scmp.eq.s32.totalorder %s31, 0
      %p81 = por %p79, %p80
      %s82 = sadd.s32 %s33, %s34
      %s83 = sadd.s32 %s47, %s43
      %s84 = ssub.s32 %s32, %s51
      %s85 = ssub.s32 %s82, %s83
      %s86 = sor.u32 %s84, %s85
      %p87 = scmp.eq.s32.totalorder %s86, 0
      %s89 = sadd.s32 %s88, 1
      %s90 = scalar_select %p87, %s88, %s89
      %p93 = pneg %p87
      %p94 = scmp.eq.s32.totalorder %s25, 1
      %p95 = por %p93, %p94
      %p96 = scmp.ne.s32.totalorder %s88, %s91
      %p97 = scmp.eq.s32.totalorder %s25, 0
      %p98 = por %p96, %p97
      %p99 = scmp.ne.s32.totalorder %s88, %s91
      %p100 = scmp.eq.s32.totalorder %s30, 1
      %p101 = por %p99, %p100
      %p102 = scmp.ne.s32.totalorder %s91, %s92
      %p103 = scmp.eq.s32.totalorder %s30, 0
      %p104 = por %p102, %p103
      %p105 = scmp.ne.s32.totalorder %s91, %s92
      %p106 = scmp.eq.s32.totalorder %s31, 1
      %p107 = por %p105, %p106
      %p109 = scmp.ne.s32.totalorder %s92, %s108
      %p110 = scmp.eq.s32.totalorder %s31, 0
      %p111 = por %p109, %p110
      %s113 = sadd.s32 %s112, 1
      %p116 = scmp.eq.s32.totalorder %s25, 1
      %p117 = scmp.ne.s32.totalorder %s112, %s114
      %p118 = scmp.eq.s32.totalorder %s25, 0
      %p119 = por %p117, %p118
      %p120 = scmp.ne.s32.totalorder %s112, %s114
      %p121 = scmp.eq.s32.totalorder %s30, 1
      %p122 = por %p120, %p121
      %p123 = scmp.ne.s32.totalorder %s114, %s115
      %p124 = scmp.eq.s32.totalorder %s30, 0
      %p125 = por %p123, %p124
      %p126 = scmp.ne.s32.totalorder %s114, %s115
      %p127 = scmp.eq.s32.totalorder %s31, 1
      %p128 = por %p126, %p127
      %p130 = scmp.ne.s32.totalorder %s115, %s129
      %p131 = scmp.eq.s32.totalorder %s31, 0
      %p132 = por %p130, %p131
      %s134 = sadd.s32 %s133, 1
      %p137 = scmp.eq.s32.totalorder %s25, 1
      %p138 = scmp.ne.s32.totalorder %s133, %s135
      %p139 = scmp.eq.s32.totalorder %s25, 0
      %p140 = por %p138, %p139
      %p141 = scmp.ne.s32.totalorder %s133, %s135
      %p142 = scmp.eq.s32.totalorder %s30, 1
      %p143 = por %p141, %p142
      %p144 = scmp.ne.s32.totalorder %s135, %s136
      %p145 = scmp.eq.s32.totalorder %s30, 0
      %p146 = por %p144, %p145
      %p147 = scmp.ne.s32.totalorder %s135, %s136
      %p148 = scmp.eq.s32.totalorder %s31, 1
      %p149 = por %p147, %p148
      %p151 = scmp.ne.s32.totalorder %s136, %s150
      %p152 = scmp.eq.s32.totalorder %s31, 0
      %p153 = por %p151, %p152
      %s154 = sadd.s32 %s33, %s34
      %s155 = sadd.s32 %s47, %s43
      %s156 = ssub.s32 %s32, %s51
      %s157 = ssub.s32 %s154, %s155
      %s158 = sor.u32 %s156, %s157
      %p159 = scmp.eq.s32.totalorder %s158, 0
      %s161 = sadd.s32 %s160, 1
      %s162 = scalar_select %p159, %s160, %s161
      %p165 = pneg %p159
      %p166 = scmp.eq.s32.totalorder %s25, 1
      %p167 = por %p165, %p166
      %p168 = scmp.ne.s32.totalorder %s160, %s163
      %p169 = scmp.eq.s32.totalorder %s25, 0
      %p170 = por %p168, %p169
      %p171 = scmp.ne.s32.totalorder %s160, %s163
      %p172 = scmp.eq.s32.totalorder %s30, 1
      %p173 = por %p171, %p172
      %p174 = scmp.ne.s32.totalorder %s163, %s164
      %p175 = scmp.eq.s32.totalorder %s30, 0
      %p176 = por %p174, %p175
      %p177 = scmp.ne.s32.totalorder %s163, %s164
      %p178 = scmp.eq.s32.totalorder %s31, 1
      %p179 = por %p177, %p178
      %p181 = scmp.ne.s32.totalorder %s164, %s180
      %p182 = scmp.eq.s32.totalorder %s31, 0
      %p183 = por %p181, %p182
      %s184 = sadd.s32 %s33, %s34
      %s185 = sadd.s32 %s47, %s43
      %s186 = ssub.s32 %s32, %s51
      %s187 = ssub.s32 %s184, %s185
      %s188 = sor.u32 %s186, %s187
      %p189 = scmp.eq.s32.totalorder %s188, 0
      %s191 = sadd.s32 %s190, 1
      %s192 = scalar_select %p189, %s190, %s191
      %p195 = pneg %p189
      %p196 = scmp.eq.s32.totalorder %s25, 1
      %p197 = por %p195, %p196
      %p198 = scmp.ne.s32.totalorder %s190, %s193
      %p199 = scmp.eq.s32.totalorder %s25, 0
      %p200 = por %p198, %p199
      %p201 = scmp.ne.s32.totalorder %s190, %s193
      %p202 = scmp.eq.s32.totalorder %s30, 1
      %p203 = por %p201, %p202
      %p204 = scmp.ne.s32.totalorder %s193, %s194
      %p205 = scmp.eq.s32.totalorder %s30, 0
      %p206 = por %p204, %p205
      %p207 = scmp.ne.s32.totalorder %s193, %s194
      %p208 = scmp.eq.s32.totalorder %s31, 1
      %p209 = por %p207, %p208
      %p211 = scmp.ne.s32.totalorder %s194, %s210
      %p212 = scmp.eq.s32.totalorder %s31, 0
      %p213 = por %p211, %p212
      %s214 = ssub.s32 %s32, %s51
      %s215 = ssub.s32 %s33, %s47
      %s216 = sor.u32 %s214, %s215
      %p217 = scmp.eq.s32.totalorder %s216, 0
      %s219 = sadd.s32 %s218, 1
      %s220 = scalar_select %p217, %s218, %s219
      %p223 = pneg %p217
      %p224 = scmp.eq.s32.totalorder %s25, 1
      %p225 = por %p223, %p224
      %p226 = scmp.ne.s32.totalorder %s218, %s221
      %p227 = scmp.eq.s32.totalorder %s25, 0
      %p228 = por %p226, %p227
      %p229 = scmp.ne.s32.totalorder %s218, %s221
      %p230 = scmp.eq.s32.totalorder %s30, 1
      %p231 = por %p229, %p230
      %p232 = scmp.ne.s32.totalorder %s221, %s222
      %p233 = scmp.eq.s32.totalorder %s30, 0
      %p234 = por %p232, %p233
      %p235 = scmp.ne.s32.totalorder %s221, %s222
      %p236 = scmp.eq.s32.totalorder %s31, 1
      %p237 = por %p235, %p236
      %p239 = scmp.ne.s32.totalorder %s222, %s238
      %p240 = scmp.eq.s32.totalorder %s31, 0
      %p241 = por %p239, %p240
      %p242 = scmp.le.s32.totalorder 1, %s25
      %p243 = scmp.lt.s32.totalorder %s25, 3
      %p244 = pnand %p242, %p243
      %p245 = pneg %p244
      // Predicated region
      $region9: #{tpu_custom_call.1} parent=5 // pred_check
        _
      $region10: #{tpu_custom_call.1} parent=5 // pred_check_branch
        %247 = sbr.rel (%p244) target = $region12
      $region11: #{tpu_custom_call.1} parent=5 // pred_region
        %s248 = ssub.s32 %s25, 1
        // Predicated region
        $region13: #{tpu_custom_call.1} parent=11 // pred_check
          %p249 = pneg %p125
        $region14: #{tpu_custom_call.1} parent=11 // pred_check_branch
          %251 = sbr.rel (%p249) target = $region16
        $region15: #{tpu_custom_call.1} parent=11 // pred_region
          %s253 = ssub.s32 64, 64
          %254 = vsyncadd [#allocation10], %s253
          %s256 = sshll.u32 [#allocation11], 4
          %s257 = int_to_ptr.vmem [resolvable:$true] %s256
          %259 = dma.hbm_to_vmem [thread:$0]  %s2, 64, %s257, [#allocation10]
        $region16: #{tpu_custom_call.1} parent=11 // pred_fallthru
          _
        // Predicated region
        $region17: #{tpu_custom_call.1} parent=11 // pred_check
          %p260 = pneg %p146
        $region18: #{tpu_custom_call.1} parent=11 // pred_check_branch
          %262 = sbr.rel (%p260) target = $region20
        $region19: #{tpu_custom_call.1} parent=11 // pred_region
          _
        $region20: #{tpu_custom_call.1} parent=11 // pred_fallthru
          _
      $region12: #{tpu_custom_call.1} parent=5 // pred_fallthru
        _
      %p263 = scmp.lt.s32.totalorder %s25, 2
      // Predicated region
      $region21: #{tpu_custom_call.1} parent=5 // pred_check
        %p264 = pneg %p263
      $region22: #{tpu_custom_call.1} parent=5 // pred_check_branch
        %266 = sbr.rel (%p264) target = $region24
      $region23: #{tpu_custom_call.1} parent=5 // pred_region
        // Predicated region
        $region25: #{tpu_custom_call.1} parent=23 // pred_check
          %p267 = pneg %p68
        $region26: #{tpu_custom_call.1} parent=23 // pred_check_branch
          %269 = sbr.rel (%p267) target = $region28
        $region27: #{tpu_custom_call.1} parent=23 // pred_region
          %s270 = sand.u32 %s58, 1
          %s271 = scalar_lea.sflag [#allocation7], %s270
          %s272 = sand.u32 %s58, 1
          %s273 = smul.addr %s272, 16
          %s274 = scalar_lea.vmem [#allocation6], %s273
          %s275 = sadd.s32 %s33, %s34
          %s276 = smul.u32 2, %s275
          %s278 = ssub.s32 256, 256
          %279 = vsyncadd %s271, %s278
          %s280 = smul.addr %s32, 2
          %s281 = sadd.s32 %s276, %s280
          %s282 = smul.addr %s281, 128
          %s283 = scalar_lea.hbm %s0, %s282
          %s285 = sshll.u32 %s274, 4
          %s286 = int_to_ptr.vmem [resolvable:$true] %s285
          %288 = dma.hbm_to_vmem [thread:$0]  %s283, 256, %s286, %s271
        $region28: #{tpu_custom_call.1} parent=23 // pred_fallthru
          _
        // Predicated region
        $region29: #{tpu_custom_call.1} parent=23 // pred_check
          %p289 = pneg %p98
        $region30: #{tpu_custom_call.1} parent=23 // pred_check_branch
          %291 = sbr.rel (%p289) target = $region32
        $region31: #{tpu_custom_call.1} parent=23 // pred_region
          %s292 = sand.u32 %s25, 1
          %s293 = scalar_lea.sflag [#allocation10], %s292
          %s294 = sand.u32 %s88, 1
          %s295 = smul.addr %s294, 16
          %s296 = scalar_lea.vmem [#allocation9], %s295
          %s297 = sadd.s32 %s33, %s34
          %s298 = smul.u32 2, %s297
          %s300 = ssub.s32 256, 256
          %301 = vsyncadd %s293, %s300
          %s302 = smul.addr %s32, 2
          %s303 = sadd.s32 %s298, %s302
          %s304 = smul.addr %s303, 128
          %s305 = scalar_lea.hbm %s1, %s304
          %s307 = sshll.u32 %s296, 4
          %s308 = int_to_ptr.vmem [resolvable:$true] %s307
          %310 = dma.hbm_to_vmem [thread:$0]  %s305, 256, %s308, %s293
        $region32: #{tpu_custom_call.1} parent=23 // pred_fallthru
          _
      $region24: #{tpu_custom_call.1} parent=5 // pred_fallthru
        _
      %p311 = scmp.le.s32.totalorder 1, %s25
      %p312 = scmp.lt.s32.totalorder %s25, 3
      %p313 = pnand %p311, %p312
      %p314 = pneg %p313
      // Predicated region
      $region33: #{tpu_custom_call.1} parent=5 // pred_check
        _
      $region34: #{tpu_custom_call.1} parent=5 // pred_check_branch
        %316 = sbr.rel (%p313) target = $region36
      $region35: #{tpu_custom_call.1} parent=5 // pred_region
        %s317 = ssub.s32 %s25, 1
        %s318 = sand.u32 %s61, 1
        %s319 = scalar_lea.sflag [#allocation7], %s318
        %s320 = sand.u32 %s61, 1
        %s321 = smul.addr %s320, 16
        %s322 = scalar_lea.vmem [#allocation6], %s321
        // Predicated region
        $region37: #{tpu_custom_call.1} parent=35 // pred_check
          %p323 = pneg %p74
        $region38: #{tpu_custom_call.1} parent=35 // pred_check_branch
          %325 = sbr.rel (%p323) target = $region40
        $region39: #{tpu_custom_call.1} parent=35 // pred_region
          %326 = dma.done %s319, 256
        $region40: #{tpu_custom_call.1} parent=35 // pred_fallthru
          _
        %s327 = sand.u32 %s30, 1
        %s328 = scalar_lea.sflag [#allocation10], %s327
        %s329 = sand.u32 %s91, 1
        %s330 = smul.addr %s329, 16
        %s331 = scalar_lea.vmem [#allocation9], %s330
        // Predicated region
        $region41: #{tpu_custom_call.1} parent=35 // pred_check
          %p332 = pneg %p104
        $region42: #{tpu_custom_call.1} parent=35 // pred_check_branch
          %334 = sbr.rel (%p332) target = $region44
        $region43: #{tpu_custom_call.1} parent=35 // pred_region
          %335 = dma.done %s328, 256
        $region44: #{tpu_custom_call.1} parent=35 // pred_fallthru
          _
        // Predicated region
        $region45: #{tpu_custom_call.1} parent=35 // pred_check
          %p336 = pneg %p125
        $region46: #{tpu_custom_call.1} parent=35 // pred_check_branch
          %338 = sbr.rel (%p336) target = $region48
        $region47: #{tpu_custom_call.1} parent=35 // pred_region
          %339 = dma.done [#allocation10], 64
        $region48: #{tpu_custom_call.1} parent=35 // pred_fallthru
          _
        %s340 = sand.u32 %s61, 1
        %s341 = scalar_lea.sflag [#allocation7], %s340
        %s342 = sand.u32 %s61, 1
        %s343 = smul.addr %s342, 16
        %s344 = scalar_lea.vmem [#allocation6], %s343
        %p345 = pneg %p74
        %p346 = pneg %p71
        %s347 = sand.u32 %s30, 1
        %s348 = scalar_lea.sflag [#allocation10], %s347
        %s349 = sand.u32 %s91, 1
        %s350 = smul.addr %s349, 16
        %s351 = scalar_lea.vmem [#allocation9], %s350
        %p352 = pneg %p104
        %p353 = pneg %p101
        %p354 = pneg %p125
        %p355 = pneg %p122
        %p356 = pneg %p146
        %p357 = pneg %p143
        %p358 = pneg %p176
        %p359 = pneg %p173
        %s360 = sand.u32 %s163, 1
        %s361 = scalar_lea.sflag [#allocation8], %s360
        %s362 = sand.u32 %s163, 1
        %s363 = smul.addr %s362, 4
        %s364 = scalar_lea.vmem [#allocation12], %s363
        %p365 = pneg %p206
        %p366 = pneg %p203
        %s367 = sand.u32 %s30, 1
        %s368 = scalar_lea.sflag [#allocation14], %s367
        %s369 = sand.u32 %s193, 1
        %s370 = smul.addr %s369, 4
        %s371 = scalar_lea.vmem [#allocation13], %s370
        %p372 = pneg %p234
        %p373 = pneg %p231
        %s374 = sand.u32 %s30, 1
        %s375 = scalar_lea.sflag [#allocation14], %s374
        %s376 = sand.u32 %s221, 1
        %s377 = smul.addr %s376, 4
        %s378 = scalar_lea.vmem [#allocation15], %s377
        %s379 = sadd.s32 %s36, %s37
        %s380 = smul.u32 2, %s379
        %s381 = sadd.s32 %s36, %s37
        %s382 = smul.u32 2, %s381
        %s383 = sadd.s32 %s36, %s37
        %s384 = smul.u32 2, %s383
        %s385 = sadd.s32 %s36, %s37
        %s386 = smul.u32 2, %s385
        %v387 = vld [vmem:[#allocation11] sm:$0xf]
        %v388 = vld [vmem:[%s322] sm:$0xff]
        %v389 = vld [vmem:[%s322 + $0x8] sm:$0xff]
        %vm390 = vcmask 64512
        %v392 = vsel %vm390, %v387, 0
        %394 = vmatprep.subr.mxu0 0.0
        %395 = vmatpush1.msra.mxu0 0.0
        %396 = vmatprep.subr.mxu0 0.0
        %397 = vmatpush1.msra.mxu0 0.0
        %398 = vmatprep.subr.mxu0 0.0
        %399 = vmatpush1.msra.mxu0 0.0
        %400 = vmatprep.subr.mxu0 0.0
        %401 = vmatpush1.msra.mxu0 0.0
        %402 = vmatprep.subr.mxu0 0.0
        %403 = vmatpush1.msra.mxu0 0.0
        %404 = vmatprep.subr.mxu0 0.0
        %405 = vmatpush1.msra.mxu0 0.0
        %406 = vmatprep.subr.mxu0 0.0
        %407 = vmatpush1.msra.mxu0 0.0
        %408 = vmatprep.subr.mxu0 0.0
        %409 = vmatpush1.msra.mxu0 0.0
        %410 = vmatprep.subr.mxu0 0.0
        %411 = vmatpush1.msra.mxu0 0.0
        %412 = vmatprep.subr.mxu0 0.0
        %413 = vmatpush1.msra.mxu0 0.0
        %414 = vmatprep.subr.mxu0 0.0
        %415 = vmatpush1.msra.mxu0 0.0
        %416 = vmatprep.subr.mxu0 0.0
        %417 = vmatpush1.msra.mxu0 0.0
        %418 = vmatprep.subr.mxu0 0.0
        %419 = vmatpush1.msra.mxu0 0.0
        %420 = vmatprep.subr.mxu0 0.0
        %421 = vmatpush1.msra.mxu0 0.0
        %422 = vmatprep.subr.mxu0 0.0
        %423 = vmatpush1.msra.mxu0 0.0
        %424 = vmatprep.subr.mxu0 %v389
        %425 = vmatpush1.msra.mxu0 %v388
        %426 = vmatprep.subr.mxu0 0.0
        %427 = vmatpush2.msra.mxu0 0.0
        %428 = vmatprep.subr.mxu0 0.0
        %429 = vmatpush2.msra.mxu0 0.0
        %430 = vmatprep.subr.mxu0 0.0
        %431 = vmatpush2.msra.mxu0 0.0
        %432 = vmatprep.subr.mxu0 0.0
        %433 = vmatpush2.msra.mxu0 0.0
        %434 = vmatprep.subr.mxu0 0.0
        %435 = vmatpush2.msra.mxu0 0.0
        %436 = vmatprep.subr.mxu0 0.0
        %437 = vmatpush2.msra.mxu0 0.0
        %438 = vmatprep.subr.mxu0 0.0
        %439 = vmatpush2.msra.mxu0 0.0
        %440 = vmatprep.subr.mxu0 0.0
        %441 = vmatpush2.msra.mxu0 0.0
        %442 = vmatprep.subr.mxu0 0.0
        %443 = vmatpush2.msra.mxu0 0.0
        %444 = vmatprep.subr.mxu0 0.0
        %445 = vmatpush2.msra.mxu0 0.0
        %446 = vmatprep.subr.mxu0 0.0
        %447 = vmatpush2.msra.mxu0 0.0
        %448 = vmatprep.subr.mxu0 0.0
        %449 = vmatpush2.msra.mxu0 0.0
        %450 = vmatprep.subr.mxu0 0.0
        %451 = vmatpush2.msra.mxu0 0.0
        %452 = vmatprep.subr.mxu0 0.0
        %453 = vmatpush2.msra.mxu0 0.0
        %454 = vmatprep.subr.mxu0 0.0
        %455 = vmatpush2.msra.mxu0 0.0
        %456 = vmatprep.subr.mxu0 0.0
        %457 = vmatpush2.msra.mxu0 0.0
        %458 = vmatprep.mubr.f32.mxu0 0.0
        %459 = vmatmul.mubr.f32.gmra.mxu0 %v392
        %v460 = vpop.f32.mrf.mxu0
        %v461 = vadd.f32 0.0, %v460
        %v462 = vpop.f32.mrf.mxu0
        %v463 = vadd.f32 0.0, %v462
        %464 = vdwg.mxu0
        %v465 = vld [vmem:[%s3] sm:$0xf]
        %v466 = vld [vmem:[%s331] sm:$0xff]
        %v467 = vld [vmem:[%s331 + $0x8] sm:$0xff]
        %v469 = vsel %vm390, %v465, 0
        %471 = vmatprep.subr.mxu0 0.0
        %472 = vmatpush1.msra.mxu0 0.0
        %473 = vmatprep.subr.mxu0 0.0
        %474 = vmatpush1.msra.mxu0 0.0
        %475 = vmatprep.subr.mxu0 0.0
        %476 = vmatpush1.msra.mxu0 0.0
        %477 = vmatprep.subr.mxu0 0.0
        %478 = vmatpush1.msra.mxu0 0.0
        %479 = vmatprep.subr.mxu0 0.0
        %480 = vmatpush1.msra.mxu0 0.0
        %481 = vmatprep.subr.mxu0 0.0
        %482 = vmatpush1.msra.mxu0 0.0
        %483 = vmatprep.subr.mxu0 0.0
        %484 = vmatpush1.msra.mxu0 0.0
        %485 = vmatprep.subr.mxu0 0.0
        %486 = vmatpush1.msra.mxu0 0.0
        %487 = vmatprep.subr.mxu0 0.0
        %488 = vmatpush1.msra.mxu0 0.0
        %489 = vmatprep.subr.mxu0 0.0
        %490 = vmatpush1.msra.mxu0 0.0
        %491 = vmatprep.subr.mxu0 0.0
        %492 = vmatpush1.msra.mxu0 0.0
        %493 = vmatprep.subr.mxu0 0.0
        %494 = vmatpush1.msra.mxu0 0.0
        %495 = vmatprep.subr.mxu0 0.0
        %496 = vmatpush1.msra.mxu0 0.0
        %497 = vmatprep.subr.mxu0 0.0
        %498 = vmatpush1.msra.mxu0 0.0
        %499 = vmatprep.subr.mxu0 0.0
        %500 = vmatpush1.msra.mxu0 0.0
        %501 = vmatprep.subr.mxu0 %v467
        %502 = vmatpush1.msra.mxu0 %v466
        %503 = vmatprep.subr.mxu0 0.0
        %504 = vmatpush2.msra.mxu0 0.0
        %505 = vmatprep.subr.mxu0 0.0
        %506 = vmatpush2.msra.mxu0 0.0
        %507 = vmatprep.subr.mxu0 0.0
        %508 = vmatpush2.msra.mxu0 0.0
        %509 = vmatprep.subr.mxu0 0.0
        %510 = vmatpush2.msra.mxu0 0.0
        %511 = vmatprep.subr.mxu0 0.0
        %512 = vmatpush2.msra.mxu0 0.0
        %513 = vmatprep.subr.mxu0 0.0
        %514 = vmatpush2.msra.mxu0 0.0
        %515 = vmatprep.subr.mxu0 0.0
        %516 = vmatpush2.msra.mxu0 0.0
        %517 = vmatprep.subr.mxu0 0.0
        %518 = vmatpush2.msra.mxu0 0.0
        %519 = vmatprep.subr.mxu0 0.0
        %520 = vmatpush2.msra.mxu0 0.0
        %521 = vmatprep.subr.mxu0 0.0
        %522 = vmatpush2.msra.mxu0 0.0
        %523 = vmatprep.subr.mxu0 0.0
        %524 = vmatpush2.msra.mxu0 0.0
        %525 = vmatprep.subr.mxu0 0.0
        %526 = vmatpush2.msra.mxu0 0.0
        %527 = vmatprep.subr.mxu0 0.0
        %528 = vmatpush2.msra.mxu0 0.0
        %529 = vmatprep.subr.mxu0 0.0
        %530 = vmatpush2.msra.mxu0 0.0
        %531 = vmatprep.subr.mxu0 0.0
        %532 = vmatpush2.msra.mxu0 0.0
        %533 = vmatprep.subr.mxu0 0.0
        %534 = vmatpush2.msra.mxu0 0.0
        %535 = vmatprep.mubr.f32.mxu0 0.0
        %536 = vmatmul.mubr.f32.gmra.mxu0 %v469
        %v537 = vpop.f32.mrf.mxu0
        %v538 = vadd.f32 0.0, %v537
        %v539 = vpop.f32.mrf.mxu0
        %v540 = vadd.f32 0.0, %v539
        %541 = vdwg.mxu0
        %v542 = vpack.c.bf16 %v461, %v461
        %v543 = vpack.c.bf16 %v463, %v463
        %v546 = vcombine.low %v542, %v543
        %v548 = vunpack.c.l.s4 1983009808
        %v549 = vunpack.c.0.s8 %v548
        %v550 = vlaneseq
        %v551 = vshrl.u32 %v550, 7
        %v552 = vsub.s32 %v549, %v551
        %v553 = vrot.slane %v546, %v552
        %555 = vst [vmem:[%s364] sm:$0xf] %v553
        %v556 = vpack.c.bf16 %v538, %v538
        %v557 = vpack.c.bf16 %v540, %v540
        %v560 = vcombine.low %v556, %v557
        %v562 = vunpack.c.l.s4 1983009808
        %v563 = vunpack.c.0.s8 %v562
        %v564 = vlaneseq
        %v565 = vshrl.u32 %v564, 7
        %v566 = vsub.s32 %v563, %v565
        %v567 = vrot.slane %v560, %v566
        %569 = vst [vmem:[%s371] sm:$0xf] %v567
        %p570 = scmp.eq.s32.totalorder %s37, 0
        // Predicated region
        $region49: #{tpu_custom_call.1} parent=35 // pred_check
          %p571 = pneg %p570
        $region50: #{tpu_custom_call.1} parent=35 // pred_check_branch
          %573 = sbr.rel (%p571) target = $region52
        $region51: #{tpu_custom_call.1} parent=35 // pred_region
          %vm574 = vcmask 3072
          %575 = vst.msk [vmem:[#allocation2] sm:$0xf] %vm574, 0.0
          %576 = vst.msk [vmem:[#allocation3] sm:$0xf] %vm574, 0.0
          %577 = vst.msk [vmem:[#allocation4] sm:$0xf] %vm574, 0.0
          %578 = vst.msk [vmem:[#allocation5] sm:$0xf] %vm574, 0.0
        $region52: #{tpu_custom_call.1} parent=35 // pred_fallthru
          _
        %v579 = vld [vmem:[#allocation2] sm:$0xf]
        %vm580 = vcmask 1043456
        %v581 = vsel %vm580, %v461, 0.0
        %v582 = vsel %vm580, %v463, 0.0
        %v583 = vadd.f32 %v581, %v582
        %584 = vadd.xlane.f32.xlu0 %v583
        %v585 = vpop.xlane.xlu0 %584
        %v586 = vadd.f32 %v579, %v585
        %vm587 = vcmask 3072
        %588 = vst.msk [vmem:[#allocation2] sm:$0xf] %vm587, %v586
        %v589 = vld [vmem:[#allocation3] sm:$0xf]
        %v590 = vmul.f32 %v461, %v461
        %v591 = vmul.f32 %v463, %v463
        %v592 = vsel %vm580, %v590, 0.0
        %v593 = vsel %vm580, %v591, 0.0
        %v594 = vadd.f32 %v592, %v593
        %595 = vadd.xlane.f32.xlu0 %v594
        %v596 = vpop.xlane.xlu0 %595
        %v597 = vadd.f32 %v589, %v596
        %598 = vst.msk [vmem:[#allocation3] sm:$0xf] %vm587, %v597
        %v599 = vld [vmem:[#allocation4] sm:$0xf]
        %v600 = vsel %vm580, %v538, 0.0
        %v601 = vsel %vm580, %v540, 0.0
        %v602 = vadd.f32 %v600, %v601
        %603 = vadd.xlane.f32.xlu0 %v602
        %v604 = vpop.xlane.xlu0 %603
        %v605 = vadd.f32 %v599, %v604
        %606 = vst.msk [vmem:[#allocation4] sm:$0xf] %vm587, %v605
        %v607 = vld [vmem:[#allocation5] sm:$0xf]
        %v608 = vmul.f32 %v538, %v538
        %v609 = vmul.f32 %v540, %v540
        %v610 = vsel %vm580, %v608, 0.0
        %v611 = vsel %vm580, %v609, 0.0
        %v612 = vadd.f32 %v610, %v611
        %613 = vadd.xlane.f32.xlu0 %v612
        %v614 = vpop.xlane.xlu0 %613
        %v615 = vadd.f32 %v607, %v614
        %616 = vst.msk [vmem:[#allocation5] sm:$0xf] %vm587, %v615
        // Predicated region
        $region53: #{tpu_custom_call.1} parent=35 // pred_check
          %p617 = pneg %p570
        $region54: #{tpu_custom_call.1} parent=35 // pred_check_branch
          %619 = sbr.rel (%p617) target = $region56
        $region55: #{tpu_custom_call.1} parent=35 // pred_region
          %v620 = vld [vmem:[#allocation2] sm:$0xf]
          %v621 = vld [vmem:[#allocation3] sm:$0xf]
          %v622 = vld [vmem:[#allocation4] sm:$0xf]
          %v623 = vld [vmem:[#allocation5] sm:$0xf]
          %625 = vrot.lane.b32.xlu0 %v621, 1
          %v626 = vpop.permute.xlu0 %625
          %629 = vrot.lane.b32.xlu0 %v622, 2
          %v630 = vpop.permute.xlu0 %629
          %633 = vrot.lane.b32.xlu0 %v623, 3
          %v634 = vpop.permute.xlu0 %633
          %vm636 = vcmask 7168
          %v637 = vsel %vm636, %v620, %v626
          %vm638 = vcmask 15360
          %v639 = vsel %vm638, %v637, %v630
          %vm640 = vcmask 23552
          %v641 = vsel %vm640, %v639, %v634
          %vm642 = vcmask 27648
          %643 = vst.msk [vmem:[%s378] sm:$0xf] %vm642, %v641
        $region56: #{tpu_custom_call.1} parent=35 // pred_fallthru
          _
        %s644 = sand.u32 %s163, 1
        %s645 = scalar_lea.sflag [#allocation8], %s644
        %s646 = sand.u32 %s163, 1
        %s647 = smul.addr %s646, 4
        %s648 = scalar_lea.vmem [#allocation12], %s647
        %s649 = sand.u32 %s30, 1
        %s650 = scalar_lea.sflag [#allocation14], %s649
        %s651 = sand.u32 %s193, 1
        %s652 = smul.addr %s651, 4
        %s653 = scalar_lea.vmem [#allocation13], %s652
        %s654 = sand.u32 %s30, 1
        %s655 = scalar_lea.sflag [#allocation14], %s654
        %s656 = sand.u32 %s221, 1
        %s657 = smul.addr %s656, 4
        %s658 = scalar_lea.vmem [#allocation15], %s657
        // Predicated region
        $region57: #{tpu_custom_call.1} parent=35 // pred_check
          %p659 = pneg %p173
        $region58: #{tpu_custom_call.1} parent=35 // pred_check_branch
          %661 = sbr.rel (%p659) target = $region60
        $region59: #{tpu_custom_call.1} parent=35 // pred_region
          %s662 = sadd.s32 %s36, %s37
          %s663 = smul.u32 2, %s662
          %s665 = ssub.s32 64, 64
          %666 = vsyncadd %s645, %s665
          %s667 = smul.addr %s35, 2
          %s668 = sadd.s32 %s663, %s667
          %s669 = smul.addr %s668, 32
          %s670 = scalar_lea.hbm %s4, %s669
          %s672 = sshll.u32 %s648, 4
          %s673 = int_to_ptr.vmem [resolvable:$true] %s672
          %675 = dma.vmem_to_hbm [thread:$0]  %s673, 64, %s670, %s645
        $region60: #{tpu_custom_call.1} parent=35 // pred_fallthru
          _
        // Predicated region
        $region61: #{tpu_custom_call.1} parent=35 // pred_check
          %p676 = pneg %p203
        $region62: #{tpu_custom_call.1} parent=35 // pred_check_branch
          %678 = sbr.rel (%p676) target = $region64
        $region63: #{tpu_custom_call.1} parent=35 // pred_region
          %s679 = sadd.s32 %s36, %s37
          %s680 = smul.u32 2, %s679
          %s682 = ssub.s32 64, 64
          %683 = vsyncadd %s650, %s682
          %s684 = smul.addr %s35, 2
          %s685 = sadd.s32 %s680, %s684
          %s686 = smul.addr %s685, 32
          %s687 = scalar_lea.hbm %s5, %s686
          %s689 = sshll.u32 %s653, 4
          %s690 = int_to_ptr.vmem [resolvable:$true] %s689
          %692 = dma.vmem_to_hbm [thread:$0]  %s690, 64, %s687, %s650
        $region64: #{tpu_custom_call.1} parent=35 // pred_fallthru
          _
        // Predicated region
        $region65: #{tpu_custom_call.1} parent=35 // pred_check
          %p693 = pneg %p231
        $region66: #{tpu_custom_call.1} parent=35 // pred_check_branch
          %695 = sbr.rel (%p693) target = $region68
        $region67: #{tpu_custom_call.1} parent=35 // pred_region
          %s697 = ssub.s32 64, 64
          %698 = vsyncadd %s655, %s697
          %s699 = sadd.s32 %s36, %s35
          %s700 = smul.addr %s699, 64
          %s701 = scalar_lea.hbm %s6, %s700
          %s703 = sshll.u32 %s658, 4
          %s704 = int_to_ptr.vmem [resolvable:$true] %s703
          %706 = dma.vmem_to_hbm [thread:$0]  %s704, 64, %s701, %s655
        $region68: #{tpu_custom_call.1} parent=35 // pred_fallthru
          _
      $region36: #{tpu_custom_call.1} parent=5 // pred_fallthru
        _
      %p707 = scmp.le.s32.totalorder 2, %s25
      // Predicated region
      $region69: #{tpu_custom_call.1} parent=5 // pred_check
        %p708 = pneg %p707
      $region70: #{tpu_custom_call.1} parent=5 // pred_check_branch
        %710 = sbr.rel (%p708) target = $region72
      $region71: #{tpu_custom_call.1} parent=5 // pred_region
        %s711 = ssub.s32 %s25, 2
        // Predicated region
        $region73: #{tpu_custom_call.1} parent=71 // pred_check
          %p712 = pneg %p179
        $region74: #{tpu_custom_call.1} parent=71 // pred_check_branch
          %714 = sbr.rel (%p712) target = $region76
        $region75: #{tpu_custom_call.1} parent=71 // pred_region
          %s715 = sand.u32 %s164, 1
          %s716 = scalar_lea.sflag [#allocation8], %s715
          %s717 = sand.u32 %s164, 1
          %s718 = smul.addr %s717, 4
          %s719 = scalar_lea.vmem [#allocation12], %s718
          %720 = dma.done %s716, 64
        $region76: #{tpu_custom_call.1} parent=71 // pred_fallthru
          _
        // Predicated region
        $region77: #{tpu_custom_call.1} parent=71 // pred_check
          %p721 = pneg %p209
        $region78: #{tpu_custom_call.1} parent=71 // pred_check_branch
          %723 = sbr.rel (%p721) target = $region80
        $region79: #{tpu_custom_call.1} parent=71 // pred_region
          %s724 = sand.u32 %s31, 1
          %s725 = scalar_lea.sflag [#allocation14], %s724
          %s726 = sand.u32 %s194, 1
          %s727 = smul.addr %s726, 4
          %s728 = scalar_lea.vmem [#allocation13], %s727
          %729 = dma.done %s725, 64
        $region80: #{tpu_custom_call.1} parent=71 // pred_fallthru
          _
        // Predicated region
        $region81: #{tpu_custom_call.1} parent=71 // pred_check
          %p730 = pneg %p237
        $region82: #{tpu_custom_call.1} parent=71 // pred_check_branch
          %732 = sbr.rel (%p730) target = $region84
        $region83: #{tpu_custom_call.1} parent=71 // pred_region
          %s733 = sand.u32 %s31, 1
          %s734 = scalar_lea.sflag [#allocation14], %s733
          %s735 = sand.u32 %s222, 1
          %s736 = smul.addr %s735, 4
          %s737 = scalar_lea.vmem [#allocation15], %s736
          %738 = dma.done %s734, 64
        $region84: #{tpu_custom_call.1} parent=71 // pred_fallthru
          _
      $region72: #{tpu_custom_call.1} parent=5 // pred_fallthru
        _
    $region6: #{tpu_custom_call.1} parent=1 // loop_footer
      %s29 = sadd.s32 1, %s25
    $region7: #{tpu_custom_call.1} parent=1 // loop_footer_branch
      %24 = sbr.rel target = $region3
    $region8: #{tpu_custom_call.1} parent=1 // loop_exit
      _
    %739 = vsyncpa [#allocation7], 1
    %s740 = scalar_lea.sflag [#allocation7], 1
    %741 = vsyncpa %s740, 1
    %742 = vsyncpa [#allocation10], 1
    %s743 = scalar_lea.sflag [#allocation10], 1
    %744 = vsyncpa %s743, 1
    %745 = vsyncpa [#allocation8], 1
    %s746 = scalar_lea.sflag [#allocation8], 1
    %747 = vsyncpa %s746, 1
    %748 = vsyncpa [#allocation14], 1
    %s749 = scalar_lea.sflag [#allocation14], 1
    %750 = vsyncpa %s749, 1

</llo_original>
